<compile_context>
chip_gen: v6e
topology: v6e:2x2x1
jax: 0.10.0
libtpu: 0.0.40
codegen_flags: <defaults>
</compile_context>

<pallas_src>
import functools

import jax
import jax.numpy as jnp
from jax.experimental import pallas as pl
from jax.experimental.pallas import tpu as pltpu


def _round_up(a: int, b: int) -> int:
    return ((a + b - 1) // b) * b


def _largest_divisor(total: int, cap: int) -> int:
    """Largest d <= cap that divides total (total >= 1)."""
    d = max(1, min(cap, total))
    while total % d:
        d -= 1
    return d


def _choose_kn_tiles(k: int, n: int):
    """Padded K/N extents and tile sizes (independent of batch)."""
    # K (reduction / lane dim of x, sublane dim of W^T)
    if k <= 1024:
        kp, tk = k, k                      # full-dim block: no padding needed
    else:
        kp = _round_up(k, 128)             # pad only to lane alignment
        tk = 128 * _largest_divisor(kp // 128, 8)   # tk <= 1024, divides kp
    # N (output lane dim)
    if n <= 1024:
        np_, tn = n, n
    else:
        np_ = _round_up(n, 128)
        tn = 128 * _largest_divisor(np_ // 128, 8)
    return kp, tk, np_, tn


def _choose_m_tile(m: int):
    """Padded M extent and tile size."""
    if m <= 1024:
        return m, m                        # full batch: W streamed from HBM once
    mp = _round_up(m, 8)                   # pad only to sublane alignment
    tm = 8 * _largest_divisor(mp // 8, 128)  # tm <= 1024, divides mp
    return mp, tm


def _linear_kernel(x_ref, w_ref, o_ref):
    # Grid = (M tiles, N tiles, K tiles); K innermost (reduction).
    # Accumulate straight into the (f32, resident) output block.
    @pl.when(pl.program_id(2) == 0)
    def _init():
        o_ref[...] = jnp.zeros_like(o_ref)

    o_ref[...] += jnp.dot(
        x_ref[...], w_ref[...], preferred_element_type=jnp.float32
    )


def make_linear_net(weight):
    """Builds a forward fn equivalent to nn.Linear(in, out, bias=False).

    weight: (output_dim, input_dim) float32 (PyTorch layout).
    Returned fn accepts x of shape (..., input_dim) and returns (..., output_dim).
    """
    weight = jnp.asarray(weight, jnp.float32)
    out_dim, in_dim = weight.shape
    kp, tk, np_, tn = _choose_kn_tiles(in_dim, out_dim)

    # Pad + transpose the constant weight exactly once, outside the jitted call.
    w_t = weight.T  # (in_dim, out_dim)
    if (kp, np_) != (in_dim, out_dim):
        w_t = jnp.zeros((kp, np_), jnp.float32).at[:in_dim, :out_dim].set(w_t)

    @jax.jit
    def _forward2d(x2d, wt):
        m = x2d.shape[0]
        mp, tm = _choose_m_tile(m)
        tn_l, tk_l = tn, tk

        # Make sure the two "parallel" grid axes expose >= 2 tiles where possible
        # so both v7x TensorCores get work.
        if (mp // tm) * (np_ // tn_l) == 1:
            if np_ % 256 == 0:
                tn_l = np_ // 2
            elif mp % 16 == 0:
                tm = mp // 2

        x_p = x2d
        if (mp, kp) != (m, in_dim):
            x_p = jnp.zeros((mp, kp), x2d.dtype).at[:m, :in_dim].set(x2d)

        grid = (mp // tm, np_ // tn_l, kp // tk_l)
        grid_m, grid_n, _ = grid

        cost = pl.CostEstimate(
            flops=2 * mp * np_ * kp,
            transcendentals=0,
            # x is re-read once per N tile, W once per M tile.
            bytes_accessed=4 * (grid_n * mp * kp + grid_m * kp * np_ + mp * np_),
        )

        out_p = pl.pallas_call(
            _linear_kernel,
            out_shape=jax.ShapeDtypeStruct((mp, np_), jnp.float32),
            grid_spec=pltpu.PrefetchScalarGridSpec(
                num_scalar_prefetch=0,
                grid=grid,
                in_specs=[
                    pl.BlockSpec((tm, tk_l), lambda i, j, k: (i, k)),
                    pl.BlockSpec((tk_l, tn_l), lambda i, j, k: (k, j)),
                ],
                out_specs=pl.BlockSpec((tm, tn_l), lambda i, j, k: (i, j)),
            ),
            compiler_params=pltpu.CompilerParams(
                dimension_semantics=("parallel", "parallel", "arbitrary"),
                # Above the 16/32 MiB scoped defaults (v5e/v6e/v7x), below v7x's
                # 64 MiB physical; double-buffered tiles here stay <= ~25 MiB.
                vmem_limit_bytes=48 * 1024 * 1024,
            ),
            cost_estimate=cost,
        )(x_p, wt)

        return out_p[:m, :out_dim]

    def forward(x):
        x = jnp.asarray(x, jnp.float32)
        lead = x.shape[:-1]
        x2d = x.reshape(-1, in_dim)
        out = _forward2d(x2d, w_t)
        return out.reshape(*lead, out_dim)

    return forward


if __name__ == "__main__":
    # Small shapes consistent with the module's forward: x is (batch, input_dim).
    input_dim, output_dim = 32, 16
    batch = 8

    key = jax.random.PRNGKey(0)
    x = jax.random.normal(key, (batch, input_dim), dtype=jnp.float32)

    # Module __init__ sets weight = ones with shape (output_dim, input_dim).
    w = jnp.ones((output_dim, input_dim), dtype=jnp.float32)

    linear_net = make_linear_net(w)
    out = linear_net(x)
    jax.block_until_ready(out)

    ref = x @ w.T
    assert out.shape == (batch, output_dim), out.shape
    assert jnp.allclose(out, ref, atol=1e-5, rtol=1e-5)

    print("KERNEL_OK")
</pallas_src>

<mosaic_0001>
module attributes {stable_mosaic.version = 11 : i64} {
  func.func @_linear_kernel(%arg0: i32, %arg1: i32, %arg2: i32, %arg3: memref<8x32xf32, #tpu.memory_space<vmem>>, %arg4: memref<32x16xf32, #tpu.memory_space<vmem>>, %arg5: memref<8x16xf32, #tpu.memory_space<vmem>>) attributes {dimension_semantics = [#tpu.dimension_semantics<parallel>, #tpu.dimension_semantics<parallel>, #tpu.dimension_semantics<arbitrary>], iteration_bounds = array<i64: 1, 1, 1>, scalar_prefetch = 0 : i64, scratch_operands = 0 : i64, tpu.core_type = #tpu.core_type<tc>, window_params = [{transform_indices = @transform_0, window_bounds = array<i64: 8, 32>}, {transform_indices = @transform_1, window_bounds = array<i64: 32, 16>}, {transform_indices = @transform_2, window_bounds = array<i64: 8, 16>}]} {
    %c0_i32 = arith.constant 0 : i32
    %0 = arith.cmpi eq, %arg2, %c0_i32 : i32
    %1 = arith.extui %0 : i1 to i32
    %c0_i32_0 = arith.constant 0 : i32
    %2 = arith.cmpi ne, %1, %c0_i32_0 : i32
    scf.if %2 {
      %cst_8 = arith.constant 0.000000e+00 : f32
      %9 = vector.broadcast %cst_8 : f32 to vector<8x16xf32>
      %c0_9 = arith.constant 0 : index
      %c0_10 = arith.constant 0 : index
      %10 = vector.load %arg5[%c0_9, %c0_10] : memref<8x16xf32, #tpu.memory_space<vmem>>, vector<8x16xf32>
      tpu.vector_store %arg5[%c0_9, %c0_10], %9 {strides = array<i32>} : memref<8x16xf32, #tpu.memory_space<vmem>>, vector<8x16xf32>,
    } else {
    }
    %c0 = arith.constant 0 : index
    %c0_1 = arith.constant 0 : index
    %3 = vector.load %arg5[%c0, %c0_1] : memref<8x16xf32, #tpu.memory_space<vmem>>, vector<8x16xf32>
    %c0_2 = arith.constant 0 : index
    %c0_3 = arith.constant 0 : index
    %4 = vector.load %arg3[%c0_2, %c0_3] : memref<8x32xf32, #tpu.memory_space<vmem>>, vector<8x32xf32>
    %c0_4 = arith.constant 0 : index
    %c0_5 = arith.constant 0 : index
    %5 = vector.load %arg4[%c0_4, %c0_5] : memref<32x16xf32, #tpu.memory_space<vmem>>, vector<32x16xf32>
    %cst = arith.constant dense<0.000000e+00> : vector<8x16xf32>
    %6 = tpu.matmul %4, %5, %cst {dimension_numbers = #tpu.dot_dimension_numbers<[1], [0], [0], [1], [0, 0, 1, 1], [], []>} : vector<8x32xf32>, vector<32x16xf32>, vector<8x16xf32> -> vector<8x16xf32>
    %7 = arith.addf %3, %6 : vector<8x16xf32>
    %c0_6 = arith.constant 0 : index
    %c0_7 = arith.constant 0 : index
    %8 = vector.load %arg5[%c0_6, %c0_7] : memref<8x16xf32, #tpu.memory_space<vmem>>, vector<8x16xf32>
    tpu.vector_store %arg5[%c0_6, %c0_7], %7 {strides = array<i32>} : memref<8x16xf32, #tpu.memory_space<vmem>>, vector<8x16xf32>,
    return
  }
  func.func @transform_0(%arg0: i32, %arg1: i32, %arg2: i32) -> (i32, i32) {
    %c0_i32 = arith.constant 0 : i32
    return %arg0, %arg2 : i32, i32
  }
  func.func @transform_1(%arg0: i32, %arg1: i32, %arg2: i32) -> (i32, i32) {
    %c0_i32 = arith.constant 0 : i32
    return %arg2, %arg1 : i32, i32
  }
  func.func @transform_2(%arg0: i32, %arg1: i32, %arg2: i32) -> (i32, i32) {
    %c0_i32 = arith.constant 0 : i32
    return %arg0, %arg1 : i32, i32
  }
}

</mosaic_0001>

<llo_original>
// kernel: _forward2d.1
$region0: #{_forward2d.1}
  #allocation0 [shape = 'u32[]', space=smem, size = 0x4, offset = 0x4, fixed_abs, tag = 'smem constant byte address 0x4 - core index']
  #allocation1 [shape = 'u32[144,128]{1,0:T(1,128)}', space=vmem, size = 0x12000, scoped, tag = 'internal scratch']
  %s0 = inlined_call_operand.vmem [shape: f32[8,32], index: 0, kind: input, shape index: {}]
  %s1 = inlined_call_operand.vmem [shape: f32[32,16], index: 1, kind: input, shape index: {}]
  %s2 = inlined_call_operand.hbm [shape: f32[8,16], index: 2, kind: output, shape index: {}]
  %s3 = sld [smem:[#allocation0]]
  $region22: #{_forward2d.1} parent=0
    _
  %s5 = ssub.s32 1, %s3
  %s6 = scalar_select 0, %s5, %s3
  $region1: #{_forward2d.1} parent=0
    #allocation2 [shape = 'u8[4096]{0}', space=vmem, size = 0x1000, scoped, tag = 'output window, operand 0, single buffered']
    #allocation3 [shape = 's32[1]{0}', space=sflag, size = 0x4, scoped, tag = 'scoped memory for _forward2d.1']
    %7 = vsyncpa [#allocation3], 0
    // Predicated region
    $region2: #{_forward2d.1} parent=1 // pred_check
      _
    $region3: #{_forward2d.1} parent=1 // pred_check_branch
      %9 = sbr.rel (0) target = $region5
    $region4: #{_forward2d.1} parent=1 // pred_region
      _
    $region5: #{_forward2d.1} parent=1 // pred_fallthru
      _
    // Predicated region
    $region6: #{_forward2d.1} parent=1 // pred_check
      _
    $region7: #{_forward2d.1} parent=1 // pred_check_branch
      %11 = sbr.rel (0) target = $region9
    $region8: #{_forward2d.1} parent=1 // pred_region
      _
    $region9: #{_forward2d.1} parent=1 // pred_fallthru
      _
    %p12 = scmp.eq.s32.totalorder 0, 0
    // Predicated region
    $region10: #{_forward2d.1} parent=1 // pred_check
      %p13 = pneg %p12
    $region11: #{_forward2d.1} parent=1 // pred_check_branch
      %15 = sbr.rel (%p13) target = $region13
    $region12: #{_forward2d.1} parent=1 // pred_region
      %vm16 = vcmask 130048
      %17 = vst.msk [vmem:[#allocation2] sm:$0xff] %vm16, 0.0
    $region13: #{_forward2d.1} parent=1 // pred_fallthru
      _
    %v18 = vld [vmem:[#allocation2] sm:$0xff]
    %v19 = vld [vmem:[%s0] sm:$0xff]
    %v20 = vld [vmem:[%s1] sm:$0xff]
    %v21 = vld [vmem:[%s1 + $0x8] sm:$0xff]
    %v22 = vld [vmem:[%s1 + $0x10] sm:$0xff]
    %v23 = vld [vmem:[%s1 + $0x18] sm:$0xff]
    %vm24 = vcmask 261120
    %v26 = vsel %vm24, %v19, 0
    %28 = vmatprep.subr.mxu0 0.0
    %29 = vmatpush1.msra.mxu0 0.0
    %30 = vmatprep.subr.mxu0 0.0
    %31 = vmatpush1.msra.mxu0 0.0
    %32 = vmatprep.subr.mxu0 0.0
    %33 = vmatpush1.msra.mxu0 0.0
    %34 = vmatprep.subr.mxu0 0.0
    %35 = vmatpush1.msra.mxu0 0.0
    %36 = vmatprep.subr.mxu0 0.0
    %37 = vmatpush1.msra.mxu0 0.0
    %38 = vmatprep.subr.mxu0 0.0
    %39 = vmatpush1.msra.mxu0 0.0
    %40 = vmatprep.subr.mxu0 0.0
    %41 = vmatpush1.msra.mxu0 0.0
    %42 = vmatprep.subr.mxu0 0.0
    %43 = vmatpush1.msra.mxu0 0.0
    %44 = vmatprep.subr.mxu0 0.0
    %45 = vmatpush1.msra.mxu0 0.0
    %46 = vmatprep.subr.mxu0 0.0
    %47 = vmatpush1.msra.mxu0 0.0
    %48 = vmatprep.subr.mxu0 0.0
    %49 = vmatpush1.msra.mxu0 0.0
    %50 = vmatprep.subr.mxu0 0.0
    %51 = vmatpush1.msra.mxu0 0.0
    %52 = vmatprep.subr.mxu0 0.0
    %53 = vmatpush1.msra.mxu0 %v23
    %54 = vmatprep.subr.mxu0 0.0
    %55 = vmatpush1.msra.mxu0 %v22
    %56 = vmatprep.subr.mxu0 0.0
    %57 = vmatpush1.msra.mxu0 %v21
    %58 = vmatprep.subr.mxu0 0.0
    %59 = vmatpush1.msra.mxu0 %v20
    %60 = vmatprep.subr.mxu0 0.0
    %61 = vmatpush2.msra.mxu0 0.0
    %62 = vmatprep.subr.mxu0 0.0
    %63 = vmatpush2.msra.mxu0 0.0
    %64 = vmatprep.subr.mxu0 0.0
    %65 = vmatpush2.msra.mxu0 0.0
    %66 = vmatprep.subr.mxu0 0.0
    %67 = vmatpush2.msra.mxu0 0.0
    %68 = vmatprep.subr.mxu0 0.0
    %69 = vmatpush2.msra.mxu0 0.0
    %70 = vmatprep.subr.mxu0 0.0
    %71 = vmatpush2.msra.mxu0 0.0
    %72 = vmatprep.subr.mxu0 0.0
    %73 = vmatpush2.msra.mxu0 0.0
    %74 = vmatprep.subr.mxu0 0.0
    %75 = vmatpush2.msra.mxu0 0.0
    %76 = vmatprep.subr.mxu0 0.0
    %77 = vmatpush2.msra.mxu0 0.0
    %78 = vmatprep.subr.mxu0 0.0
    %79 = vmatpush2.msra.mxu0 0.0
    %80 = vmatprep.subr.mxu0 0.0
    %81 = vmatpush2.msra.mxu0 0.0
    %82 = vmatprep.subr.mxu0 0.0
    %83 = vmatpush2.msra.mxu0 0.0
    %84 = vmatprep.subr.mxu0 0.0
    %85 = vmatpush2.msra.mxu0 0.0
    %86 = vmatprep.subr.mxu0 0.0
    %87 = vmatpush2.msra.mxu0 0.0
    %88 = vmatprep.subr.mxu0 0.0
    %89 = vmatpush2.msra.mxu0 0.0
    %90 = vmatprep.subr.mxu0 0.0
    %91 = vmatpush2.msra.mxu0 0.0
    %92 = vmatprep.mubr.f32.mxu0 0.0
    %93 = vmatmul.mubr.f32.gmra.mxu0 %v26
    %v94 = vpop.f32.mrf.mxu0
    %v95 = vadd.f32 0.0, %v94
    %v96 = vpop.f32.mrf.mxu0
    %97 = vdwg.mxu0
    %v98 = vadd.f32 %v18, %v95
    %vm99 = vcmask 130048
    %100 = vst.msk [vmem:[#allocation2] sm:$0xff] %vm99, %v98
    // Predicated region
    $region14: #{_forward2d.1} parent=1 // pred_check
      _
    $region15: #{_forward2d.1} parent=1 // pred_check_branch
      %102 = sbr.rel (0) target = $region17
    $region16: #{_forward2d.1} parent=1 // pred_region
      %s104 = ssub.s32 128, 128
      %105 = vsyncadd [#allocation3], %s104
      %s107 = sshll.u32 [#allocation2], 4
      %s108 = int_to_ptr.vmem [resolvable:$true] %s107
      %110 = dma.vmem_to_hbm [thread:$0]  %s108, 128, %s2, [#allocation3]
    $region17: #{_forward2d.1} parent=1 // pred_fallthru
      _
    // Predicated region
    $region18: #{_forward2d.1} parent=1 // pred_check
      _
    $region19: #{_forward2d.1} parent=1 // pred_check_branch
      %112 = sbr.rel (0) target = $region21
    $region20: #{_forward2d.1} parent=1 // pred_region
      %113 = dma.done [#allocation3], 128
    $region21: #{_forward2d.1} parent=1 // pred_fallthru
      _
    %114 = vsyncpa [#allocation3], 1

</llo_original>
